<compile_context>
chip_gen: v7x
topology: tpu7x:2x2x1
jax: 0.10.0
libtpu: 0.0.40
codegen_flags: <defaults>
</compile_context>

<pallas_src>
import functools
import math

import jax
import jax.numpy as jnp
from jax.experimental import pallas as pl
from jax.experimental.pallas import tpu as pltpu

_BN_EPS = 1e-5
_MAX_SINGLE_K = 2560      # largest padded-K that stays a single reduction block
_TK_TILED = 512           # reduction tile when K is split


def _round_up(x, m):
    return (x + m - 1) // m * m


def _padded_k(K):
    """Padded reduction length used for both the weight prep and the patch slab."""
    Kp = _round_up(K, 128)
    if Kp > _MAX_SINGLE_K:
        Kp = _round_up(Kp, _TK_TILED)
    return Kp


# ----------------------------------------------------------------------------
# Pallas kernels
# ----------------------------------------------------------------------------
def _conv_mm_kernel(x_ref, w_ref, s_ref, b_ref, *refs, slope, has_residual):
    """Fused im2col matmul (bf16 in, f32 acc) + LeakyReLU + affine [+ residual].

    grid = (M tiles, N tiles, K tiles); K is the reduction ('arbitrary') axis.
    """
    if has_residual:
        res_ref, o_ref, acc_ref = refs
    else:
        o_ref, acc_ref = refs

    @pl.when(pl.program_id(2) == 0)
    def _():
        acc_ref[...] = jnp.zeros_like(acc_ref)

    acc_ref[...] += jnp.dot(x_ref[...], w_ref[...],
                            preferred_element_type=jnp.float32)

    @pl.when(pl.program_id(2) == pl.num_programs(2) - 1)
    def _():
        y = acc_ref[...]
        if slope != 1.0:                       # statically skip for plain conv heads
            y = jnp.where(y >= 0.0, y, y * slope)
        y = y * s_ref[...] + b_ref[...]
        if has_residual:
            y = y + res_ref[...].astype(jnp.float32)
        o_ref[...] = y.astype(o_ref.dtype)


def _maxpool_kernel(xp_ref, o_ref, *, k, H, W):
    """Separable k x k max-pool (stride 1, 'same') on a -inf padded (1,Hp,Wp,ct) block."""
    x = xp_ref[...]
    r = x[:, 0:H, :, :]
    for dh in range(1, k):
        r = jnp.maximum(r, x[:, dh:dh + H, :, :])
    out = r[:, :, 0:W, :]
    for dw in range(1, k):
        out = jnp.maximum(out, r[:, :, dw:dw + W, :])
    o_ref[...] = out


# ----------------------------------------------------------------------------
# Fused matmul wrapper (adaptive tiling)
# ----------------------------------------------------------------------------
def fused_matmul(x2d, w2d, scale, bias, *, slope, out_dtype, residual=None):
    """(M,Kp)bf16 @ (Kp,N)bf16 -> LeakyReLU -> *scale+bias [+residual] -> out_dtype."""
    M, Kp = x2d.shape
    Kw, Nc = w2d.shape
    assert Kw == Kp, (Kw, Kp)

    # Tile selection: size tm to the real M (no padding of tiny late-stage layers);
    # single full-K block when it fits, else 512-wide reduction tiles; tn=256 for wide
    # channel counts so v7x's two TensorCores both get N tiles.
    tm = min(256, _round_up(M, 8))
    Mp = _round_up(M, tm)
    tk = Kp if Kp <= _MAX_SINGLE_K else _TK_TILED
    assert Kp % tk == 0
    if Nc >= 512 and Nc % 256 == 0:
        tn = 256
    elif Nc % 128 == 0:
        tn = min(Nc, 512)
    else:
        tn = Nc                     # full-dim escape for 32/64-channel layers
    Ncp = _round_up(Nc, tn)

    xp = x2d if Mp == M else jnp.pad(x2d, ((0, Mp - M), (0, 0)))
    wp, sp, bp = w2d, scale, bias
    if Ncp > Nc:
        wp = jnp.pad(w2d, ((0, 0), (0, Ncp - Nc)))
        sp = jnp.pad(scale, ((0, 0), (0, Ncp - Nc)))
        bp = jnp.pad(bias, ((0, 0), (0, Ncp - Nc)))

    has_res = residual is not None
    inputs = [xp, wp, sp, bp]
    in_specs = [
        pl.BlockSpec((tm, tk), lambda i, j, k: (i, k)),
        pl.BlockSpec((tk, tn), lambda i, j, k: (k, j)),
        pl.BlockSpec((1, tn), lambda i, j, k: (0, j)),
        pl.BlockSpec((1, tn), lambda i, j, k: (0, j)),
    ]
    if has_res:
        rp = residual
        if Mp > M or Ncp > Nc:
            rp = jnp.pad(residual, ((0, Mp - M), (0, Ncp - Nc)))
        inputs.append(rp)
        in_specs.append(pl.BlockSpec((tm, tn), lambda i, j, k: (i, j)))

    out = pl.pallas_call(
        functools.partial(_conv_mm_kernel, slope=slope, has_residual=has_res),
        out_shape=jax.ShapeDtypeStruct((Mp, Ncp), out_dtype),
        grid_spec=pltpu.PrefetchScalarGridSpec(
            num_scalar_prefetch=0,
            grid=(Mp // tm, Ncp // tn, Kp // tk),
            in_specs=in_specs,
            out_specs=pl.BlockSpec((tm, tn), lambda i, j, k: (i, j)),
            scratch_shapes=[pltpu.VMEM((tm, tn), jnp.float32)],
        ),
        compiler_params=pltpu.CompilerParams(
            dimension_semantics=("parallel", "parallel", "arbitrary"),
            vmem_limit_bytes=32 * 1024 * 1024),
    )(*inputs)

    if Mp > M or Ncp > Nc:
        out = out[:M, :Nc]
    return out


# ----------------------------------------------------------------------------
# Convolution wrapper (im2col glue + Pallas matmul)
# ----------------------------------------------------------------------------
@functools.partial(jax.jit,
                   static_argnames=("ksize", "stride", "padding", "slope", "out_dtype"))
def conv2d_fused(x, w2d, scale, bias, residual, *,
                 ksize, stride, padding, slope, out_dtype):
    N, H, W, C = x.shape
    Kp, cout = w2d.shape
    Ho = (H + 2 * padding - ksize) // stride + 1
    Wo = (W + 2 * padding - ksize) // stride + 1
    M = N * Ho * Wo
    K = ksize * ksize * C

    xb = x.astype(jnp.bfloat16)
    if ksize == 1 and stride == 1 and padding == 0:
        patches = xb.reshape(M, C)
        if Kp > K:
            patches = jnp.pad(patches, ((0, 0), (0, Kp - K)))
    else:
        if padding:
            xb = jnp.pad(xb, ((0, 0), (padding, padding), (padding, padding), (0, 0)))
        cols = []
        for dh in range(ksize):
            for dw in range(ksize):
                cols.append(xb[:, dh:dh + stride * Ho:stride,
                               dw:dw + stride * Wo:stride, :])
        if Kp > K:                                   # fold K zero-pad into the concat
            cols.append(jnp.zeros((N, Ho, Wo, Kp - K), jnp.bfloat16))
        patches = jnp.concatenate(cols, axis=-1).reshape(M, Kp)

    res2d = None
    if residual is not None:
        res2d = residual.reshape(M, cout).astype(jnp.bfloat16)

    y = fused_matmul(patches, w2d, scale, bias,
                     slope=slope, out_dtype=out_dtype, residual=res2d)
    return y.reshape(N, Ho, Wo, cout)


@functools.partial(jax.jit, static_argnames=("k",))
def maxpool_same(x, k):
    N, H, W, C = x.shape
    p = k // 2
    xp = jnp.pad(x, ((0, 0), (p, p), (p, p), (0, 0)),
                 constant_values=float("-inf"))
    Hp, Wp = H + 2 * p, W + 2 * p
    ct = 128 if C % 128 == 0 else C
    return pl.pallas_call(
        functools.partial(_maxpool_kernel, k=k, H=H, W=W),
        out_shape=jax.ShapeDtypeStruct((N, H, W, C), x.dtype),
        grid_spec=pltpu.PrefetchScalarGridSpec(
            num_scalar_prefetch=0,
            grid=(N, C // ct),
            in_specs=[pl.BlockSpec((1, Hp, Wp, ct), lambda n, c: (n, 0, 0, c))],
            out_specs=pl.BlockSpec((1, H, W, ct), lambda n, c: (n, 0, 0, c)),
        ),
        compiler_params=pltpu.CompilerParams(
            dimension_semantics=("parallel", "parallel")),
    )(xp)


def myconv_apply(x, p, ksize, stride, padding, residual=None):
    # MyConv / BasicBlock branch: conv (no bias) -> LeakyReLU(0.1) -> BatchNorm(eval)
    return conv2d_fused(x, p["w2d"], p["scale"], p["bias"], residual,
                        ksize=ksize, stride=stride, padding=padding,
                        slope=0.1, out_dtype=jnp.bfloat16)


def plainconv_apply(x, p, ksize, stride, padding):
    # plain nn.Conv2d (bias=True), no activation / BN; f32 head output
    return conv2d_fused(x, p["w2d"], p["scale"], p["bias"], None,
                        ksize=ksize, stride=stride, padding=padding,
                        slope=1.0, out_dtype=jnp.float32)


def upsample2(x):  # nearest, scale_factor=2
    return jnp.repeat(jnp.repeat(x, 2, axis=1), 2, axis=2)


# ----------------------------------------------------------------------------
# Parameter init (deterministic, synthetic) + matmul-ready weight prep
# ----------------------------------------------------------------------------
class KeyGen:
    def __init__(self, key):
        self.key = key

    def __call__(self):
        self.key, k = jax.random.split(self.key)
        return k


def _prep_weight(w):
    """(Cout,Cin,Kh,Kw) f32 -> (Kp, Cout) bf16 im2col weight, K zero-padded once."""
    cout, cin, kh, kw = w.shape
    K = kh * kw * cin
    Kp = _padded_k(K)
    w2d = jnp.transpose(w, (2, 3, 1, 0)).reshape(K, cout)
    if Kp > K:
        w2d = jnp.pad(w2d, ((0, Kp - K), (0, 0)))
    return w2d.astype(jnp.bfloat16)


def init_myconv(kg, cin, cout, k):
    fan_in = cin * k * k
    w = jax.random.normal(kg(), (cout, cin, k, k), jnp.float32) * math.sqrt(2.0 / fan_in)
    gamma = 1.0 + 0.05 * jax.random.normal(kg(), (cout,), jnp.float32)
    beta = 0.05 * jax.random.normal(kg(), (cout,), jnp.float32)
    scale = (gamma / jnp.sqrt(1.0 + _BN_EPS)).reshape(1, -1)   # running_var = 1
    bias = beta.reshape(1, -1)                                 # running_mean = 0
    return {"w2d": _prep_weight(w), "scale": scale, "bias": bias}


def init_plainconv(kg, cin, cout, k):
    fan_in = cin * k * k
    w = jax.random.normal(kg(), (cout, cin, k, k), jnp.float32) * math.sqrt(2.0 / fan_in)
    b = 0.05 * jax.random.normal(kg(), (cout,), jnp.float32)
    return {"w2d": _prep_weight(w),
            "scale": jnp.ones((1, cout), jnp.float32),
            "bias": b.reshape(1, -1)}


def init_basicblock(kg, cin, cout):
    # BasicBlock(in_channels=cin, out_channels=cout): 1x1 cin->cout, 3x3 cout->2*cout
    return {"conv1": init_myconv(kg, cin, cout, 1),
            "conv2": init_myconv(kg, cout, cout * 2, 3)}


def init_layer(kg, cin, cout, n_blocks):
    return {"down": init_myconv(kg, cin, cout, 3),
            "blocks": [init_basicblock(kg, cout, cin) for _ in range(n_blocks)]}


def init_convset(kg, cin, filters):
    ks = [1, 3, 1, 3, 1]
    chans = [cin] + list(filters)
    return [init_myconv(kg, chans[i], chans[i + 1], ks[i]) for i in range(5)]


def init_darknet(key, img_channel=1):
    kg = KeyGen(key)
    P = {}
    P["conv1"] = init_myconv(kg, img_channel, 32, 3)
    P["layer1"] = init_layer(kg, 32, 64, 1)
    P["layer2"] = init_layer(kg, 64, 128, 2)
    P["layer3"] = init_layer(kg, 128, 256, 8)
    P["layer4"] = init_layer(kg, 256, 512, 8)
    P["layer5"] = init_layer(kg, 512, 1024, 4)
    P["conv2"] = init_myconv(kg, 1024, 512, 1)
    P["conv3"] = init_myconv(kg, 512, 1024, 3)
    P["conv4"] = init_myconv(kg, 1024, 512, 1)
    P["conv5"] = init_myconv(kg, 2048, 512, 1)
    P["conv6"] = init_myconv(kg, 512, 1024, 3)
    P["conv7"] = init_myconv(kg, 1024, 512, 1)
    P["output1_conv1"] = init_myconv(kg, 512, 1024, 3)
    P["output1_conv2"] = init_plainconv(kg, 1024, 1024, 1)
    P["conv8"] = init_myconv(kg, 512, 256, 1)
    P["convset1"] = init_convset(kg, 768, [256, 512, 256, 512, 256])
    P["output2_conv1"] = init_myconv(kg, 256, 512, 3)
    P["output2_conv2"] = init_plainconv(kg, 512, 512, 1)
    P["conv9"] = init_myconv(kg, 768, 128, 3)
    P["convset2"] = init_convset(kg, 384, [128, 256, 128, 256, 128])
    P["output3_conv1"] = init_myconv(kg, 128, 256, 3)
    P["output3_conv2"] = init_plainconv(kg, 256, 256, 1)
    return P


# ----------------------------------------------------------------------------
# Forward pass (mirrors DarkNet.forward)
# ----------------------------------------------------------------------------
def apply_layer(x, p):
    x = myconv_apply(x, p["down"], 3, 2, 1)            # stride-2 downsample
    for bp in p["blocks"]:
        h = myconv_apply(x, bp["conv1"], 1, 1, 0)
        # residual add fused into the second conv's epilogue
        x = myconv_apply(h, bp["conv2"], 3, 1, 1, residual=x)
    return x


def apply_convset(x, ps):
    ks = [1, 3, 1, 3, 1]
    pads = [0, 1, 0, 1, 0]
    for p, k, pad in zip(ps, ks, pads):
        x = myconv_apply(x, p, k, 1, pad)
    return x


def darknet_forward(P, x_nhwc):
    conv1 = myconv_apply(x_nhwc, P["conv1"], 3, 1, 1)
    layer1 = apply_layer(conv1, P["layer1"])
    layer2 = apply_layer(layer1, P["layer2"])
    layer3 = apply_layer(layer2, P["layer3"])
    layer4 = apply_layer(layer3, P["layer4"])
    layer5 = apply_layer(layer4, P["layer5"])

    conv2 = myconv_apply(layer5, P["conv2"], 1, 1, 0)
    conv3 = myconv_apply(conv2, P["conv3"], 3, 1, 1)
    conv4 = myconv_apply(conv3, P["conv4"], 1, 1, 0)

    # SPP: stride-1 max-pools compose exactly (5∘5 = 9, 9∘5 = 13) with -inf padding,
    # so conv4 is only read once and each pool reuses the previous one.
    ssp5 = maxpool_same(conv4, 5)
    ssp9 = maxpool_same(ssp5, 5)
    ssp13 = maxpool_same(ssp9, 5)
    ssp_cat = jnp.concatenate([conv4, ssp5, ssp9, ssp13], axis=-1)

    conv5 = myconv_apply(ssp_cat, P["conv5"], 1, 1, 0)
    conv6 = myconv_apply(conv5, P["conv6"], 3, 1, 1)
    conv7 = myconv_apply(conv6, P["conv7"], 1, 1, 0)

    output1 = myconv_apply(conv7, P["output1_conv1"], 3, 1, 1)
    output1 = plainconv_apply(output1, P["output1_conv2"], 1, 1, 0)

    conv8 = myconv_apply(conv7, P["conv8"], 1, 1, 0)
    up = upsample2(conv8)
    cat = jnp.concatenate([up, layer4], axis=-1)
    convset1 = apply_convset(cat, P["convset1"])
    output2 = myconv_apply(convset1, P["output2_conv1"], 3, 1, 1)
    output2 = plainconv_apply(output2, P["output2_conv2"], 1, 1, 0)

    conv9 = myconv_apply(cat, P["conv9"], 3, 1, 1)
    up2 = upsample2(conv9)
    cat2 = jnp.concatenate([up2, layer3], axis=-1)
    convset2 = apply_convset(cat2, P["convset2"])
    output3 = myconv_apply(convset2, P["output3_conv1"], 3, 1, 1)
    output3 = plainconv_apply(output3, P["output3_conv2"], 1, 1, 0)

    return output1, output2, output3


# ----------------------------------------------------------------------------
if __name__ == "__main__":
    key = jax.random.PRNGKey(0)
    kp, kx = jax.random.split(key)

    params = init_darknet(kp, img_channel=1)

    # PyTorch-style NCHW input; spatial must be divisible by 32 (5 stride-2 stages).
    x_nchw = jax.random.normal(kx, (2, 1, 64, 64), jnp.float32)
    x_nhwc = jnp.transpose(x_nchw, (0, 2, 3, 1))   # layout: NCHW -> NHWC

    o1, o2, o3 = darknet_forward(params, x_nhwc)
    jax.block_until_ready((o1, o2, o3))

    # NHWC shapes corresponding to NCHW (2,1024,2,2), (2,512,4,4), (2,256,8,8)
    assert o1.shape == (2, 2, 2, 1024), o1.shape
    assert o2.shape == (2, 4, 4, 512), o2.shape
    assert o3.shape == (2, 8, 8, 256), o3.shape
    assert bool(jnp.all(jnp.isfinite(o1))) and bool(jnp.all(jnp.isfinite(o2))) \
        and bool(jnp.all(jnp.isfinite(o3)))

    print("KERNEL_OK")
</pallas_src>

<mosaic_0001>
module attributes {stable_mosaic.version = 11 : i64} {
  func.func @_conv_mm_kernel(%arg0: i32, %arg1: i32, %arg2: i32, %arg3: memref<256x128xbf16, #tpu.memory_space<vmem>>, %arg4: memref<128x32xbf16, #tpu.memory_space<vmem>>, %arg5: memref<1x32xf32, #tpu.memory_space<vmem>>, %arg6: memref<1x32xf32, #tpu.memory_space<vmem>>, %arg7: memref<256x32xbf16, #tpu.memory_space<vmem>>, %arg8: memref<256x32xf32, #tpu.memory_space<vmem>>) attributes {dimension_semantics = [#tpu.dimension_semantics<parallel>, #tpu.dimension_semantics<parallel>, #tpu.dimension_semantics<arbitrary>], iteration_bounds = array<i64: 32, 1, 1>, scalar_prefetch = 0 : i64, scratch_operands = 1 : i64, tpu.core_type = #tpu.core_type<tc>, window_params = [{transform_indices = @transform_0, window_bounds = array<i64: 256, 128>}, {transform_indices = @transform_1, window_bounds = array<i64: 128, 32>}, {transform_indices = @transform_2, window_bounds = array<i64: 1, 32>}, {transform_indices = @transform_3, window_bounds = array<i64: 1, 32>}, {transform_indices = @transform_4, window_bounds = array<i64: 256, 32>}]} {
    %c0_i32 = arith.constant 0 : i32
    %0 = arith.cmpi eq, %arg2, %c0_i32 : i32
    %1 = arith.extui %0 : i1 to i32
    %c0_i32_0 = arith.constant 0 : i32
    %2 = arith.cmpi ne, %1, %c0_i32_0 : i32
    scf.if %2 {
      %cst_10 = arith.constant 0.000000e+00 : f32
      %12 = vector.broadcast %cst_10 : f32 to vector<256x32xf32>
      %c0_11 = arith.constant 0 : index
      %c0_12 = arith.constant 0 : index
      %13 = vector.load %arg8[%c0_11, %c0_12] : memref<256x32xf32, #tpu.memory_space<vmem>>, vector<256x32xf32>
      tpu.vector_store %arg8[%c0_11, %c0_12], %12 {strides = array<i32>} : memref<256x32xf32, #tpu.memory_space<vmem>>, vector<256x32xf32>,
    } else {
    }
    %c0 = arith.constant 0 : index
    %c0_1 = arith.constant 0 : index
    %3 = vector.load %arg8[%c0, %c0_1] : memref<256x32xf32, #tpu.memory_space<vmem>>, vector<256x32xf32>
    %c0_2 = arith.constant 0 : index
    %c0_3 = arith.constant 0 : index
    %4 = vector.load %arg3[%c0_2, %c0_3] : memref<256x128xbf16, #tpu.memory_space<vmem>>, vector<256x128xbf16>
    %c0_4 = arith.constant 0 : index
    %c0_5 = arith.constant 0 : index
    %5 = vector.load %arg4[%c0_4, %c0_5] : memref<128x32xbf16, #tpu.memory_space<vmem>>, vector<128x32xbf16>
    %cst = arith.constant dense<0.000000e+00> : vector<256x32xf32>
    %6 = tpu.matmul %4, %5, %cst {dimension_numbers = #tpu.dot_dimension_numbers<[1], [0], [0], [1], [0, 0, 1, 1], [], []>} : vector<256x128xbf16>, vector<128x32xbf16>, vector<256x32xf32> -> vector<256x32xf32>
    %7 = arith.addf %3, %6 : vector<256x32xf32>
    %c0_6 = arith.constant 0 : index
    %c0_7 = arith.constant 0 : index
    %8 = vector.load %arg8[%c0_6, %c0_7] : memref<256x32xf32, #tpu.memory_space<vmem>>, vector<256x32xf32>
    tpu.vector_store %arg8[%c0_6, %c0_7], %7 {strides = array<i32>} : memref<256x32xf32, #tpu.memory_space<vmem>>, vector<256x32xf32>,
    %c0_i32_8 = arith.constant 0 : i32
    %9 = arith.cmpi eq, %arg2, %c0_i32_8 : i32
    %10 = arith.extui %9 : i1 to i32
    %c0_i32_9 = arith.constant 0 : i32
    %11 = arith.cmpi ne, %10, %c0_i32_9 : i32
    scf.if %11 {
      %c0_10 = arith.constant 0 : index
      %c0_11 = arith.constant 0 : index
      %12 = vector.load %arg8[%c0_10, %c0_11] : memref<256x32xf32, #tpu.memory_space<vmem>>, vector<256x32xf32>
      %cst_12 = arith.constant 0.000000e+00 : f32
      %13 = vector.broadcast %cst_12 : f32 to vector<256x32xf32>
      %14 = arith.cmpf oge, %12, %13 : vector<256x32xf32>
      %cst_13 = arith.constant 1.000000e-01 : f32
      %15 = vector.broadcast %cst_13 : f32 to vector<256x32xf32>
      %16 = arith.mulf %12, %15 : vector<256x32xf32>
      %17 = arith.select %14, %12, %16 : vector<256x32xi1>, vector<256x32xf32>
      %c0_14 = arith.constant 0 : index
      %c0_15 = arith.constant 0 : index
      %18 = vector.load %arg5[%c0_14, %c0_15] : memref<1x32xf32, #tpu.memory_space<vmem>>, vector<1x32xf32>
      %19 = vector.broadcast %18 : vector<1x32xf32> to vector<256x32xf32>
      %20 = arith.mulf %17, %19 : vector<256x32xf32>
      %c0_16 = arith.constant 0 : index
      %c0_17 = arith.constant 0 : index
      %21 = vector.load %arg6[%c0_16, %c0_17] : memref<1x32xf32, #tpu.memory_space<vmem>>, vector<1x32xf32>
      %22 = vector.broadcast %21 : vector<1x32xf32> to vector<256x32xf32>
      %23 = arith.addf %20, %22 : vector<256x32xf32>
      %24 = arith.truncf %23 : vector<256x32xf32> to vector<256x32xbf16>
      %c0_18 = arith.constant 0 : index
      %c0_19 = arith.constant 0 : index
      %25 = vector.load %arg7[%c0_18, %c0_19] : memref<256x32xbf16, #tpu.memory_space<vmem>>, vector<256x32xbf16>
      tpu.vector_store %arg7[%c0_18, %c0_19], %24 {strides = array<i32>} : memref<256x32xbf16, #tpu.memory_space<vmem>>, vector<256x32xbf16>,
    } else {
    }
    return
  }
  func.func @transform_0(%arg0: i32, %arg1: i32, %arg2: i32) -> (i32, i32) {
    %c0_i32 = arith.constant 0 : i32
    return %arg0, %arg2 : i32, i32
  }
  func.func @transform_1(%arg0: i32, %arg1: i32, %arg2: i32) -> (i32, i32) {
    %c0_i32 = arith.constant 0 : i32
    return %arg2, %arg1 : i32, i32
  }
  func.func @transform_2(%arg0: i32, %arg1: i32, %arg2: i32) -> (i32, i32) {
    %c0_i32 = arith.constant 0 : i32
    %c0_i32_0 = arith.constant 0 : i32
    return %c0_i32, %arg1 : i32, i32
  }
  func.func @transform_3(%arg0: i32, %arg1: i32, %arg2: i32) -> (i32, i32) {
    %c0_i32 = arith.constant 0 : i32
    %c0_i32_0 = arith.constant 0 : i32
    return %c0_i32, %arg1 : i32, i32
  }
  func.func @transform_4(%arg0: i32, %arg1: i32, %arg2: i32) -> (i32, i32) {
    %c0_i32 = arith.constant 0 : i32
    return %arg0, %arg1 : i32, i32
  }
}

</mosaic_0001>

<llo_original>
// kernel: conv2d_fused.1
$region0: #{conv2d_fused.1}
  #allocation0 [shape = 'u32[]', space=smem, size = 0x4, offset = 0x4, fixed_abs, tag = 'smem constant byte address 0x4 - core index']
  #allocation1 [shape = 'u32[144,128]{1,0:T(1,128)}', space=vmem, size = 0x12000, scoped, tag = 'internal scratch']
  #allocation2 [shape = 'f32[256,32]{1,0:T(8,128)}', space=vmem, size = 0x20000, scoped, tag = 'scratch operand']
  %s0 = inlined_call_operand.vmem [shape: bf16[8192,128], index: 0, kind: input, shape index: {}]
  %s1 = inlined_call_operand.vmem [shape: bf16[128,32], index: 1, kind: input, shape index: {}]
  %s2 = inlined_call_operand.vmem [shape: f32[1,32], index: 2, kind: input, shape index: {}]
  %s3 = inlined_call_operand.vmem [shape: f32[1,32], index: 3, kind: input, shape index: {}]
  %s4 = inlined_call_operand.vmem [shape: bf16[8192,32], index: 4, kind: output, shape index: {}]
  %s5 = sld [smem:[#allocation0]]
  $region57: #{conv2d_fused.1} parent=0
    _
  %s7 = ssub.s32 1, %s5
  %s8 = scalar_select 0, %s7, %s5
  loop: start=0, step=1, limit=34
  $region2: #{conv2d_fused.1} parent=0 // loop_pre_header
    _
  $region3: #{conv2d_fused.1} parent=0 // loop_header
    %s10 = sphi 0, %s14
    %p11 = scmp.ge.s32.totalorder %s10, 34
    %s17 = sphi 0, %s36
    %s18 = sphi 0, %s32
    %s19 = sphi 0, %s28
    %s20 = sphi 0, %s17
    %s21 = sphi 0, %s18
    %s22 = sphi 0, %s19
    %s23 = sphi 0, %s20
    %s24 = sphi 0, %s21
    %s25 = sphi 0, %s22
    %s41 = sphi 0, %s43
    %s44 = sphi 0, %s41
    %s45 = sphi 0, %s44
    %s61 = sphi 0, %s45
    %s69 = sphi 0, %s71
    %s72 = sphi 0, %s69
    %s73 = sphi 0, %s72
    %s89 = sphi 0, %s73
    %s95 = sphi 0, %s97
    %s98 = sphi 0, %s95
    %s99 = sphi 0, %s98
    %s115 = sphi 0, %s99
    %s121 = sphi 0, %s123
    %s124 = sphi 0, %s121
    %s125 = sphi 0, %s124
    %s141 = sphi 0, %s125
    %s149 = sphi 0, %s151
    %s152 = sphi 0, %s149
    %s153 = sphi 0, %s152
    %s169 = sphi 0, %s153
  $region4: #{conv2d_fused.1} parent=0 // loop_header_branch
    %13 = sbr.rel (%p11) target = $region8
  $region5: #{conv2d_fused.1} parent=0 // loop_body
    %s15 = ssub.s32 %s10, 1
    %s16 = ssub.s32 %s10, 2
    %s26 = sadd.s32 1, %s19
    %p27 = scmp.ge.s32.totalorder %s26, 1
    %s28 = scalar_select %p27, 0, %s26
    %s29 = sadd.s32 1, %s18
    %s30 = scalar_select %p27, %s29, %s18
    %p31 = scmp.ge.s32.totalorder %s30, 1
    %s32 = scalar_select %p31, 0, %s30
    %s33 = sadd.s32 1, %s17
    %s34 = scalar_select %p31, %s33, %s17
    %p35 = scmp.ge.s32.totalorder %s34, 32
    %s36 = scalar_select %p35, 0, %s34
    %s37 = ssub.s32 %s17, %s36
    %s38 = ssub.s32 %s19, %s28
    %s39 = sor.u32 %s37, %s38
    %p40 = scmp.eq.s32.totalorder %s39, 0
    %s42 = sadd.s32 %s41, 1
    %s43 = scalar_select %p40, %s41, %s42
    %p46 = pneg %p40
    %p47 = scmp.eq.s32.totalorder %s10, 31
    %p48 = por %p46, %p47
    %p49 = scmp.ne.s32.totalorder %s41, %s44
    %p50 = scmp.eq.s32.totalorder %s10, 0
    %p51 = por %p49, %p50
    %p52 = scmp.ne.s32.totalorder %s41, %s44
    %p53 = scmp.eq.s32.totalorder %s15, 31
    %p54 = por %p52, %p53
    %p55 = scmp.ne.s32.totalorder %s44, %s45
    %p56 = scmp.eq.s32.totalorder %s15, 0
    %p57 = por %p55, %p56
    %p58 = scmp.ne.s32.totalorder %s44, %s45
    %p59 = scmp.eq.s32.totalorder %s16, 31
    %p60 = por %p58, %p59
    %p62 = scmp.ne.s32.totalorder %s45, %s61
    %p63 = scmp.eq.s32.totalorder %s16, 0
    %p64 = por %p62, %p63
    %s65 = ssub.s32 %s19, %s28
    %s66 = ssub.s32 %s18, %s32
    %s67 = sor.u32 %s65, %s66
    %p68 = scmp.eq.s32.totalorder %s67, 0
    %s70 = sadd.s32 %s69, 1
    %s71 = scalar_select %p68, %s69, %s70
    %p74 = pneg %p68
    %p75 = scmp.eq.s32.totalorder %s10, 31
    %p76 = por %p74, %p75
    %p77 = scmp.ne.s32.totalorder %s69, %s72
    %p78 = scmp.eq.s32.totalorder %s10, 0
    %p79 = por %p77, %p78
    %p80 = scmp.ne.s32.totalorder %s69, %s72
    %p81 = scmp.eq.s32.totalorder %s15, 31
    %p82 = por %p80, %p81
    %p83 = scmp.ne.s32.totalorder %s72, %s73
    %p84 = scmp.eq.s32.totalorder %s15, 0
    %p85 = por %p83, %p84
    %p86 = scmp.ne.s32.totalorder %s72, %s73
    %p87 = scmp.eq.s32.totalorder %s16, 31
    %p88 = por %p86, %p87
    %p90 = scmp.ne.s32.totalorder %s73, %s89
    %p91 = scmp.eq.s32.totalorder %s16, 0
    %p92 = por %p90, %p91
    %s93 = ssub.s32 %s18, %s32
    %p94 = scmp.eq.s32.totalorder %s93, 0
    %s96 = sadd.s32 %s95, 1
    %s97 = scalar_select %p94, %s95, %s96
    %p100 = pneg %p94
    %p101 = scmp.eq.s32.totalorder %s10, 31
    %p102 = por %p100, %p101
    %p103 = scmp.ne.s32.totalorder %s95, %s98
    %p104 = scmp.eq.s32.totalorder %s10, 0
    %p105 = por %p103, %p104
    %p106 = scmp.ne.s32.totalorder %s95, %s98
    %p107 = scmp.eq.s32.totalorder %s15, 31
    %p108 = por %p106, %p107
    %p109 = scmp.ne.s32.totalorder %s98, %s99
    %p110 = scmp.eq.s32.totalorder %s15, 0
    %p111 = por %p109, %p110
    %p112 = scmp.ne.s32.totalorder %s98, %s99
    %p113 = scmp.eq.s32.totalorder %s16, 31
    %p114 = por %p112, %p113
    %p116 = scmp.ne.s32.totalorder %s99, %s115
    %p117 = scmp.eq.s32.totalorder %s16, 0
    %p118 = por %p116, %p117
    %s119 = ssub.s32 %s18, %s32
    %p120 = scmp.eq.s32.totalorder %s119, 0
    %s122 = sadd.s32 %s121, 1
    %s123 = scalar_select %p120, %s121, %s122
    %p126 = pneg %p120
    %p127 = scmp.eq.s32.totalorder %s10, 31
    %p128 = por %p126, %p127
    %p129 = scmp.ne.s32.totalorder %s121, %s124
    %p130 = scmp.eq.s32.totalorder %s10, 0
    %p131 = por %p129, %p130
    %p132 = scmp.ne.s32.totalorder %s121, %s124
    %p133 = scmp.eq.s32.totalorder %s15, 31
    %p134 = por %p132, %p133
    %p135 = scmp.ne.s32.totalorder %s124, %s125
    %p136 = scmp.eq.s32.totalorder %s15, 0
    %p137 = por %p135, %p136
    %p138 = scmp.ne.s32.totalorder %s124, %s125
    %p139 = scmp.eq.s32.totalorder %s16, 31
    %p140 = por %p138, %p139
    %p142 = scmp.ne.s32.totalorder %s125, %s141
    %p143 = scmp.eq.s32.totalorder %s16, 0
    %p144 = por %p142, %p143
    %s145 = ssub.s32 %s17, %s36
    %s146 = ssub.s32 %s18, %s32
    %s147 = sor.u32 %s145, %s146
    %p148 = scmp.eq.s32.totalorder %s147, 0
    %s150 = sadd.s32 %s149, 1
    %s151 = scalar_select %p148, %s149, %s150
    %p154 = pneg %p148
    %p155 = scmp.eq.s32.totalorder %s10, 31
    %p156 = por %p154, %p155
    %p157 = scmp.ne.s32.totalorder %s149, %s152
    %p158 = scmp.eq.s32.totalorder %s10, 0
    %p159 = por %p157, %p158
    %p160 = scmp.ne.s32.totalorder %s149, %s152
    %p161 = scmp.eq.s32.totalorder %s15, 31
    %p162 = por %p160, %p161
    %p163 = scmp.ne.s32.totalorder %s152, %s153
    %p164 = scmp.eq.s32.totalorder %s15, 0
    %p165 = por %p163, %p164
    %p166 = scmp.ne.s32.totalorder %s152, %s153
    %p167 = scmp.eq.s32.totalorder %s16, 31
    %p168 = por %p166, %p167
    %p170 = scmp.ne.s32.totalorder %s153, %s169
    %p171 = scmp.eq.s32.totalorder %s16, 0
    %p172 = por %p170, %p171
    %p173 = scmp.le.s32.totalorder 1, %s10
    %p174 = scmp.lt.s32.totalorder %s10, 33
    %p175 = pnand %p173, %p174
    %p176 = pneg %p175
    // Predicated region
    $region9: #{conv2d_fused.1} parent=5 // pred_check
      _
    $region10: #{conv2d_fused.1} parent=5 // pred_check_branch
      %178 = sbr.rel (%p175) target = $region12
    $region11: #{conv2d_fused.1} parent=5 // pred_region
      %s179 = ssub.s32 %s10, 1
      // Predicated region
      $region13: #{conv2d_fused.1} parent=11 // pred_check
        %p180 = pneg %p85
      $region14: #{conv2d_fused.1} parent=11 // pred_check_branch
        %182 = sbr.rel (%p180) target = $region16
      $region15: #{conv2d_fused.1} parent=11 // pred_region
        %s183 = smul.u32 16, %s22
        %p184 = scmp.lt.s32.totalorder %s183, 15
        %s185 = scalar_select %p184, %s183, 15
        %p186 = scmp.lt.s32.totalorder %s21, 0
        %s187 = scalar_select %p186, %s21, 0
        %s188 = sadd.s32 %s187, %s185
        %s189 = smul.addr %s188, 4
        %s190 = scalar_lea.vmem %s1, %s189
        %s191 = smul.u32 16, %s22
      $region16: #{conv2d_fused.1} parent=11 // pred_fallthru
        _
      // Predicated region
      $region17: #{conv2d_fused.1} parent=11 // pred_check
        %p192 = pneg %p111
      $region18: #{conv2d_fused.1} parent=11 // pred_check_branch
        %194 = sbr.rel (%p192) target = $region20
      $region19: #{conv2d_fused.1} parent=11 // pred_region
        %p195 = scmp.lt.s32.totalorder %s21, 0
        %s196 = scalar_select %p195, %s21, 0
        %s197 = scalar_lea.vmem %s2, %s196
      $region20: #{conv2d_fused.1} parent=11 // pred_fallthru
        _
      // Predicated region
      $region21: #{conv2d_fused.1} parent=11 // pred_check
        %p198 = pneg %p137
      $region22: #{conv2d_fused.1} parent=11 // pred_check_branch
        %200 = sbr.rel (%p198) target = $region24
      $region23: #{conv2d_fused.1} parent=11 // pred_region
        %p201 = scmp.lt.s32.totalorder %s21, 0
        %s202 = scalar_select %p201, %s21, 0
        %s203 = scalar_lea.vmem %s3, %s202
      $region24: #{conv2d_fused.1} parent=11 // pred_fallthru
        _
    $region12: #{conv2d_fused.1} parent=5 // pred_fallthru
      _
    %p204 = scmp.lt.s32.totalorder %s10, 32
    // Predicated region
    $region25: #{conv2d_fused.1} parent=5 // pred_check
      %p205 = pneg %p204
    $region26: #{conv2d_fused.1} parent=5 // pred_check_branch
      %207 = sbr.rel (%p205) target = $region28
    $region27: #{conv2d_fused.1} parent=5 // pred_region
      // Predicated region
      $region29: #{conv2d_fused.1} parent=27 // pred_check
        %p208 = pneg %p51
      $region30: #{conv2d_fused.1} parent=27 // pred_check_branch
        %210 = sbr.rel (%p208) target = $region32
      $region31: #{conv2d_fused.1} parent=27 // pred_region
        %s211 = smul.u32 32, %s17
        %p212 = scmp.lt.s32.totalorder %s211, 1023
        %s213 = scalar_select %p212, %s211, 1023
        %p214 = scmp.lt.s32.totalorder %s19, 0
        %s215 = scalar_select %p214, %s19, 0
        %s216 = sadd.s32 %s215, %s213
        %s217 = smul.addr %s216, 4
        %s218 = scalar_lea.vmem %s0, %s217
        %s219 = smul.u32 32, %s17
      $region32: #{conv2d_fused.1} parent=27 // pred_fallthru
        _
    $region28: #{conv2d_fused.1} parent=5 // pred_fallthru
      _
    %p220 = scmp.le.s32.totalorder 1, %s10
    %p221 = scmp.lt.s32.totalorder %s10, 33
    %p222 = pnand %p220, %p221
    %p223 = pneg %p222
    // Predicated region
    $region33: #{conv2d_fused.1} parent=5 // pred_check
      _
    $region34: #{conv2d_fused.1} parent=5 // pred_check_branch
      %225 = sbr.rel (%p222) target = $region36
    $region35: #{conv2d_fused.1} parent=5 // pred_region
      %s226 = ssub.s32 %s10, 1
      %s227 = smul.u32 32, %s20
      %p228 = scmp.lt.s32.totalorder %s227, 1023
      %s229 = scalar_select %p228, %s227, 1023
      %p230 = scmp.lt.s32.totalorder %s22, 0
      %s231 = scalar_select %p230, %s22, 0
      %s232 = sadd.s32 %s231, %s229
      %s233 = smul.addr %s232, 4
      %s234 = scalar_lea.vmem %s0, %s233
      %p235 = pneg %p57
      %p236 = pneg %p54
      %s237 = smul.u32 16, %s22
      %p238 = scmp.lt.s32.totalorder %s237, 15
      %s239 = scalar_select %p238, %s237, 15
      %p240 = scmp.lt.s32.totalorder %s21, 0
      %s241 = scalar_select %p240, %s21, 0
      %s242 = sadd.s32 %s241, %s239
      %s243 = smul.addr %s242, 4
      %s244 = scalar_lea.vmem %s1, %s243
      %p245 = pneg %p85
      %p246 = pneg %p82
      %p247 = scmp.lt.s32.totalorder %s21, 0
      %s248 = scalar_select %p247, %s21, 0
      %s249 = scalar_lea.vmem %s2, %s248
      %p250 = pneg %p111
      %p251 = pneg %p108
      %p252 = scmp.lt.s32.totalorder %s21, 0
      %s253 = scalar_select %p252, %s21, 0
      %s254 = scalar_lea.vmem %s3, %s253
      %p255 = pneg %p137
      %p256 = pneg %p134
      %p257 = pneg %p165
      %p258 = pneg %p162
      %s259 = smul.u32 32, %s20
      %p260 = scmp.lt.s32.totalorder %s259, 1023
      %s261 = scalar_select %p260, %s259, 1023
      %p262 = scmp.lt.s32.totalorder %s21, 0
      %s263 = scalar_select %p262, %s21, 0
      %s264 = sadd.s32 %s263, %s261
      %s265 = smul.addr %s264, 4
      %s266 = scalar_lea.vmem %s4, %s265
      %s267 = smul.u32 32, %s20
      %p268 = scmp.lt.s32.totalorder %s267, 1023
      %s269 = scalar_select %p268, %s267, 1023
      %p270 = scmp.lt.s32.totalorder %s22, 0
      %s271 = scalar_select %p270, %s22, 0
      %s272 = sadd.s32 %s271, %s269
      %s273 = smul.addr %s272, 4
      %s274 = scalar_lea.vmem %s0, %s273
      %s275 = smul.u32 32, %s20
      %s276 = smul.u32 16, %s22
      %p277 = scmp.lt.s32.totalorder %s276, 15
      %s278 = scalar_select %p277, %s276, 15
      %p279 = scmp.lt.s32.totalorder %s21, 0
      %s280 = scalar_select %p279, %s21, 0
      %s281 = sadd.s32 %s280, %s278
      %s282 = smul.addr %s281, 4
      %s283 = scalar_lea.vmem %s1, %s282
      %s284 = smul.u32 16, %s22
      %p285 = scmp.lt.s32.totalorder %s21, 0
      %s286 = scalar_select %p285, %s21, 0
      %s287 = scalar_lea.vmem %s2, %s286
      %p288 = scmp.lt.s32.totalorder %s21, 0
      %s289 = scalar_select %p288, %s21, 0
      %s290 = scalar_lea.vmem %s3, %s289
      %s291 = smul.u32 32, %s20
      %p292 = scmp.lt.s32.totalorder %s291, 1023
      %s293 = scalar_select %p292, %s291, 1023
      %p294 = scmp.lt.s32.totalorder %s21, 0
      %s295 = scalar_select %p294, %s21, 0
      %s296 = sadd.s32 %s295, %s293
      %s297 = smul.addr %s296, 4
      %s298 = scalar_lea.vmem %s4, %s297
      %s299 = smul.u32 32, %s20
      %p301 = scmp.eq.s32.totalorder %s22, 0
      // Predicated region
      $region37: #{conv2d_fused.1} parent=35 // pred_check
        %p302 = pneg %p301
      $region38: #{conv2d_fused.1} parent=35 // pred_check_branch
        %304 = sbr.rel (%p302) target = $region40
      $region39: #{conv2d_fused.1} parent=35 // pred_region
        %vm305 = vcmask 261120
        %306 = vst.msk [vmem:[#allocation2] sm:$0xff] %vm305, 0.0
        %307 = vst.msk [vmem:[#allocation2 + $0x8] sm:$0xff] %vm305, 0.0
        %308 = vst.msk [vmem:[#allocation2 + $0x10] sm:$0xff] %vm305, 0.0
        %309 = vst.msk [vmem:[#allocation2 + $0x18] sm:$0xff] %vm305, 0.0
        %310 = vst.msk [vmem:[#allocation2 + $0x20] sm:$0xff] %vm305, 0.0
        %311 = vst.msk [vmem:[#allocation2 + $0x28] sm:$0xff] %vm305, 0.0
        %312 = vst.msk [vmem:[#allocation2 + $0x30] sm:$0xff] %vm305, 0.0
        %313 = vst.msk [vmem:[#allocation2 + $0x38] sm:$0xff] %vm305, 0.0
        %314 = vst.msk [vmem:[#allocation2 + $0x40] sm:$0xff] %vm305, 0.0
        %315 = vst.msk [vmem:[#allocation2 + $0x48] sm:$0xff] %vm305, 0.0
        %316 = vst.msk [vmem:[#allocation2 + $0x50] sm:$0xff] %vm305, 0.0
        %317 = vst.msk [vmem:[#allocation2 + $0x58] sm:$0xff] %vm305, 0.0
        %318 = vst.msk [vmem:[#allocation2 + $0x60] sm:$0xff] %vm305, 0.0
        %319 = vst.msk [vmem:[#allocation2 + $0x68] sm:$0xff] %vm305, 0.0
        %320 = vst.msk [vmem:[#allocation2 + $0x70] sm:$0xff] %vm305, 0.0
        %321 = vst.msk [vmem:[#allocation2 + $0x78] sm:$0xff] %vm305, 0.0
        %322 = vst.msk [vmem:[#allocation2 + $0x80] sm:$0xff] %vm305, 0.0
        %323 = vst.msk [vmem:[#allocation2 + $0x88] sm:$0xff] %vm305, 0.0
        %324 = vst.msk [vmem:[#allocation2 + $0x90] sm:$0xff] %vm305, 0.0
        %325 = vst.msk [vmem:[#allocation2 + $0x98] sm:$0xff] %vm305, 0.0
        %326 = vst.msk [vmem:[#allocation2 + $0xa0] sm:$0xff] %vm305, 0.0
        %327 = vst.msk [vmem:[#allocation2 + $0xa8] sm:$0xff] %vm305, 0.0
        %328 = vst.msk [vmem:[#allocation2 + $0xb0] sm:$0xff] %vm305, 0.0
        %329 = vst.msk [vmem:[#allocation2 + $0xb8] sm:$0xff] %vm305, 0.0
        %330 = vst.msk [vmem:[#allocation2 + $0xc0] sm:$0xff] %vm305, 0.0
        %331 = vst.msk [vmem:[#allocation2 + $0xc8] sm:$0xff] %vm305, 0.0
        %332 = vst.msk [vmem:[#allocation2 + $0xd0] sm:$0xff] %vm305, 0.0
        %333 = vst.msk [vmem:[#allocation2 + $0xd8] sm:$0xff] %vm305, 0.0
        %334 = vst.msk [vmem:[#allocation2 + $0xe0] sm:$0xff] %vm305, 0.0
        %335 = vst.msk [vmem:[#allocation2 + $0xe8] sm:$0xff] %vm305, 0.0
        %336 = vst.msk [vmem:[#allocation2 + $0xf0] sm:$0xff] %vm305, 0.0
        %337 = vst.msk [vmem:[#allocation2 + $0xf8] sm:$0xff] %vm305, 0.0
      $region40: #{conv2d_fused.1} parent=35 // pred_fallthru
        _
      %v338 = vld [vmem:[#allocation2] sm:$0xff]
      %v339 = vld [vmem:[#allocation2 + $0x8] sm:$0xff]
      %v340 = vld [vmem:[#allocation2 + $0x10] sm:$0xff]
      %v341 = vld [vmem:[#allocation2 + $0x18] sm:$0xff]
      %v342 = vld [vmem:[#allocation2 + $0x20] sm:$0xff]
      %v343 = vld [vmem:[#allocation2 + $0x28] sm:$0xff]
      %v344 = vld [vmem:[#allocation2 + $0x30] sm:$0xff]
      %v345 = vld [vmem:[#allocation2 + $0x38] sm:$0xff]
      %v346 = vld [vmem:[#allocation2 + $0x40] sm:$0xff]
      %v347 = vld [vmem:[#allocation2 + $0x48] sm:$0xff]
      %v348 = vld [vmem:[#allocation2 + $0x50] sm:$0xff]
      %v349 = vld [vmem:[#allocation2 + $0x58] sm:$0xff]
      %v350 = vld [vmem:[#allocation2 + $0x60] sm:$0xff]
      %v351 = vld [vmem:[#allocation2 + $0x68] sm:$0xff]
      %v352 = vld [vmem:[#allocation2 + $0x70] sm:$0xff]
      %v353 = vld [vmem:[#allocation2 + $0x78] sm:$0xff]
      %v354 = vld [vmem:[#allocation2 + $0x80] sm:$0xff]
      %v355 = vld [vmem:[#allocation2 + $0x88] sm:$0xff]
      %v356 = vld [vmem:[#allocation2 + $0x90] sm:$0xff]
      %v357 = vld [vmem:[#allocation2 + $0x98] sm:$0xff]
      %v358 = vld [vmem:[#allocation2 + $0xa0] sm:$0xff]
      %v359 = vld [vmem:[#allocation2 + $0xa8] sm:$0xff]
      %v360 = vld [vmem:[#allocation2 + $0xb0] sm:$0xff]
      %v361 = vld [vmem:[#allocation2 + $0xb8] sm:$0xff]
      %v362 = vld [vmem:[#allocation2 + $0xc0] sm:$0xff]
      %v363 = vld [vmem:[#allocation2 + $0xc8] sm:$0xff]
      %v364 = vld [vmem:[#allocation2 + $0xd0] sm:$0xff]
      %v365 = vld [vmem:[#allocation2 + $0xd8] sm:$0xff]
      %v366 = vld [vmem:[#allocation2 + $0xe0] sm:$0xff]
      %v367 = vld [vmem:[#allocation2 + $0xe8] sm:$0xff]
      %v368 = vld [vmem:[#allocation2 + $0xf0] sm:$0xff]
      %v369 = vld [vmem:[#allocation2 + $0xf8] sm:$0xff]
      %v370 = vld [vmem:[%s274] sm:$0xf]
      %v371 = vld [vmem:[%s274 + $0x4] sm:$0xf]
      %v372 = vld [vmem:[%s274 + $0x8] sm:$0xf]
      %v373 = vld [vmem:[%s274 + $0xc] sm:$0xf]
      %v374 = vld [vmem:[%s274 + $0x10] sm:$0xf]
      %v375 = vld [vmem:[%s274 + $0x14] sm:$0xf]
      %v376 = vld [vmem:[%s274 + $0x18] sm:$0xf]
      %v377 = vld [vmem:[%s274 + $0x1c] sm:$0xf]
      %v378 = vld [vmem:[%s274 + $0x20] sm:$0xf]
      %v379 = vld [vmem:[%s274 + $0x24] sm:$0xf]
      %v380 = vld [vmem:[%s274 + $0x28] sm:$0xf]
      %v381 = vld [vmem:[%s274 + $0x2c] sm:$0xf]
      %v382 = vld [vmem:[%s274 + $0x30] sm:$0xf]
      %v383 = vld [vmem:[%s274 + $0x34] sm:$0xf]
      %v384 = vld [vmem:[%s274 + $0x38] sm:$0xf]
      %v385 = vld [vmem:[%s274 + $0x3c] sm:$0xf]
      %v386 = vld [vmem:[%s274 + $0x40] sm:$0xf]
      %v387 = vld [vmem:[%s274 + $0x44] sm:$0xf]
      %v388 = vld [vmem:[%s274 + $0x48] sm:$0xf]
      %v389 = vld [vmem:[%s274 + $0x4c] sm:$0xf]
      %v390 = vld [vmem:[%s274 + $0x50] sm:$0xf]
      %v391 = vld [vmem:[%s274 + $0x54] sm:$0xf]
      %v392 = vld [vmem:[%s274 + $0x58] sm:$0xf]
      %v393 = vld [vmem:[%s274 + $0x5c] sm:$0xf]
      %v394 = vld [vmem:[%s274 + $0x60] sm:$0xf]
      %v395 = vld [vmem:[%s274 + $0x64] sm:$0xf]
      %v396 = vld [vmem:[%s274 + $0x68] sm:$0xf]
      %v397 = vld [vmem:[%s274 + $0x6c] sm:$0xf]
      %v398 = vld [vmem:[%s274 + $0x70] sm:$0xf]
      %v399 = vld [vmem:[%s274 + $0x74] sm:$0xf]
      %v400 = vld [vmem:[%s274 + $0x78] sm:$0xf]
      %v401 = vld [vmem:[%s274 + $0x7c] sm:$0xf]
      %v402 = vld [vmem:[%s283] sm:$0xf]
      %v403 = vld [vmem:[%s283 + $0x4] sm:$0xf]
      %v404 = vld [vmem:[%s283 + $0x8] sm:$0xf]
      %v405 = vld [vmem:[%s283 + $0xc] sm:$0xf]
      %v406 = vld [vmem:[%s283 + $0x10] sm:$0xf]
      %v407 = vld [vmem:[%s283 + $0x14] sm:$0xf]
      %v408 = vld [vmem:[%s283 + $0x18] sm:$0xf]
      %v409 = vld [vmem:[%s283 + $0x1c] sm:$0xf]
      %v410 = vld [vmem:[%s283 + $0x20] sm:$0xf]
      %v411 = vld [vmem:[%s283 + $0x24] sm:$0xf]
      %v412 = vld [vmem:[%s283 + $0x28] sm:$0xf]
      %v413 = vld [vmem:[%s283 + $0x2c] sm:$0xf]
      %v414 = vld [vmem:[%s283 + $0x30] sm:$0xf]
      %v415 = vld [vmem:[%s283 + $0x34] sm:$0xf]
      %v416 = vld [vmem:[%s283 + $0x38] sm:$0xf]
      %v417 = vld [vmem:[%s283 + $0x3c] sm:$0xf]
      %v450 = vunpack.c.l.b16 %v370
      %v451 = vunpack.c.l.b16 %v371
      %v452 = vunpack.c.l.b16 %v372
      %v453 = vunpack.c.l.b16 %v373
      %v454 = vunpack.c.l.b16 %v374
      %v455 = vunpack.c.l.b16 %v375
      %v456 = vunpack.c.l.b16 %v376
      %v457 = vunpack.c.l.b16 %v377
      %v458 = vunpack.c.l.b16 %v378
      %v459 = vunpack.c.l.b16 %v379
      %v460 = vunpack.c.l.b16 %v380
      %v461 = vunpack.c.l.b16 %v381
      %v462 = vunpack.c.l.b16 %v382
      %v463 = vunpack.c.l.b16 %v383
      %v464 = vunpack.c.l.b16 %v384
      %v465 = vunpack.c.l.b16 %v385
      %v466 = vunpack.c.l.b16 %v386
      %v467 = vunpack.c.l.b16 %v387
      %v468 = vunpack.c.l.b16 %v388
      %v469 = vunpack.c.l.b16 %v389
      %v470 = vunpack.c.l.b16 %v390
      %v471 = vunpack.c.l.b16 %v391
      %v472 = vunpack.c.l.b16 %v392
      %v473 = vunpack.c.l.b16 %v393
      %v474 = vunpack.c.l.b16 %v394
      %v475 = vunpack.c.l.b16 %v395
      %v476 = vunpack.c.l.b16 %v396
      %v477 = vunpack.c.l.b16 %v397
      %v478 = vunpack.c.l.b16 %v398
      %v479 = vunpack.c.l.b16 %v399
      %v480 = vunpack.c.l.b16 %v400
      %v481 = vunpack.c.l.b16 %v401
      %v482 = vpack.c.b16 %v451, %v450
      %v483 = vpack.c.b16 %v453, %v452
      %v484 = vpack.c.b16 %v455, %v454
      %v485 = vpack.c.b16 %v457, %v456
      %v486 = vpack.c.b16 %v459, %v458
      %v487 = vpack.c.b16 %v461, %v460
      %v488 = vpack.c.b16 %v463, %v462
      %v489 = vpack.c.b16 %v465, %v464
      %v490 = vpack.c.b16 %v467, %v466
      %v491 = vpack.c.b16 %v469, %v468
      %v492 = vpack.c.b16 %v471, %v470
      %v493 = vpack.c.b16 %v473, %v472
      %v494 = vpack.c.b16 %v475, %v474
      %v495 = vpack.c.b16 %v477, %v476
      %v496 = vpack.c.b16 %v479, %v478
      %v497 = vpack.c.b16 %v481, %v480
      %v530 = vunpack.c.l.b16 %v402
      %v531 = vunpack.c.l.b16 %v403
      %v532 = vunpack.c.l.b16 %v404
      %v533 = vunpack.c.l.b16 %v405
      %v534 = vunpack.c.l.b16 %v406
      %v535 = vunpack.c.l.b16 %v407
      %v536 = vunpack.c.l.b16 %v408
      %v537 = vunpack.c.l.b16 %v409
      %v538 = vunpack.c.l.b16 %v410
      %v539 = vunpack.c.l.b16 %v411
      %v540 = vunpack.c.l.b16 %v412
      %v541 = vunpack.c.l.b16 %v413
      %v542 = vunpack.c.l.b16 %v414
      %v543 = vunpack.c.l.b16 %v415
      %v544 = vunpack.c.l.b16 %v416
      %v545 = vunpack.c.l.b16 %v417
      %v546 = vpack.c.b16 %v531, %v530
      %v547 = vpack.c.b16 %v533, %v532
      %v548 = vpack.c.b16 %v535, %v534
      %v549 = vpack.c.b16 %v537, %v536
      %v550 = vpack.c.b16 %v539, %v538
      %v551 = vpack.c.b16 %v541, %v540
      %v552 = vpack.c.b16 %v543, %v542
      %v553 = vpack.c.b16 %v545, %v544
      %562 = vmatprep.subr.bf16.mxu0 0
      %563 = vmatpush1.bf16.msra.mxu0 %v546
      %564 = vmatprep.subr.bf16.mxu0 0
      %565 = vmatpush1.bf16.msra.mxu0 %v547
      %566 = vmatprep.subr.bf16.mxu0 0
      %567 = vmatpush1.bf16.msra.mxu0 %v548
      %568 = vmatprep.subr.bf16.mxu0 0
      %569 = vmatpush1.bf16.msra.mxu0 %v549
      %570 = vmatprep.subr.bf16.mxu0 0
      %571 = vmatpush1.bf16.msra.mxu0 %v550
      %572 = vmatprep.subr.bf16.mxu0 0
      %573 = vmatpush1.bf16.msra.mxu0 %v551
      %574 = vmatprep.subr.bf16.mxu0 0
      %575 = vmatpush1.bf16.msra.mxu0 %v552
      %576 = vmatprep.subr.bf16.mxu0 0
      %577 = vmatpush1.bf16.msra.mxu0 %v553
      %578 = vmatprep.subr.bf16.mxu0 0
      %579 = vmatpush1.bf16.msra.mxu0 0
      %580 = vmatprep.subr.bf16.mxu0 0
      %581 = vmatpush1.bf16.msra.mxu0 0
      %582 = vmatprep.subr.bf16.mxu0 0
      %583 = vmatpush1.bf16.msra.mxu0 0
      %584 = vmatprep.subr.bf16.mxu0 0
      %585 = vmatpush1.bf16.msra.mxu0 0
      %586 = vmatprep.subr.bf16.mxu0 0
      %587 = vmatpush1.bf16.msra.mxu0 0
      %588 = vmatprep.subr.bf16.mxu0 0
      %589 = vmatpush1.bf16.msra.mxu0 0
      %590 = vmatprep.subr.bf16.mxu0 0
      %591 = vmatpush1.bf16.msra.mxu0 0
      %592 = vmatprep.subr.bf16.mxu0 0
      %593 = vmatpush1.bf16.msra.mxu0 0
      %594 = vmatprep.mubr.bf16.mxu0 0
      %595 = vmatmul.mubr.bf16.gmra.mrb[0].mxu0 %v482
      %v596 = vpop.f32.mrb[0].mxu0
      %v597 = vadd.f32 0.0, %v596
      %v598 = vpop.f32.mrb[0].mxu0
      %v599 = vpop.f32.mrb[0].mxu0
      %v600 = vadd.f32 0.0, %v599
      %v601 = vpop.f32.mrb[0].mxu0
      %602 = vmatprep.mubr.bf16.mxu0 0
      %603 = vmatmul.mubr.bf16.gmra.mrb[0].mxu0 %v483
      %v604 = vpop.f32.mrb[0].mxu0
      %v605 = vadd.f32 0.0, %v604
      %v606 = vpop.f32.mrb[0].mxu0
      %v607 = vpop.f32.mrb[0].mxu0
      %v608 = vadd.f32 0.0, %v607
      %v609 = vpop.f32.mrb[0].mxu0
      %610 = vmatprep.mubr.bf16.mxu0 0
      %611 = vmatmul.mubr.bf16.gmra.mrb[0].mxu0 %v484
      %v612 = vpop.f32.mrb[0].mxu0
      %v613 = vadd.f32 0.0, %v612
      %v614 = vpop.f32.mrb[0].mxu0
      %v615 = vpop.f32.mrb[0].mxu0
      %v616 = vadd.f32 0.0, %v615
      %v617 = vpop.f32.mrb[0].mxu0
      %618 = vmatprep.mubr.bf16.mxu0 0
      %619 = vmatmul.mubr.bf16.gmra.mrb[0].mxu0 %v485
      %v620 = vpop.f32.mrb[0].mxu0
      %v621 = vadd.f32 0.0, %v620
      %v622 = vpop.f32.mrb[0].mxu0
      %v623 = vpop.f32.mrb[0].mxu0
      %v624 = vadd.f32 0.0, %v623
      %v625 = vpop.f32.mrb[0].mxu0
      %626 = vmatprep.mubr.bf16.mxu0 0
      %627 = vmatmul.mubr.bf16.gmra.mrb[0].mxu0 %v486
      %v628 = vpop.f32.mrb[0].mxu0
      %v629 = vadd.f32 0.0, %v628
      %v630 = vpop.f32.mrb[0].mxu0
      %v631 = vpop.f32.mrb[0].mxu0
      %v632 = vadd.f32 0.0, %v631
      %v633 = vpop.f32.mrb[0].mxu0
      %634 = vmatprep.mubr.bf16.mxu0 0
      %635 = vmatmul.mubr.bf16.gmra.mrb[0].mxu0 %v487
      %v636 = vpop.f32.mrb[0].mxu0
      %v637 = vadd.f32 0.0, %v636
      %v638 = vpop.f32.mrb[0].mxu0
      %v639 = vpop.f32.mrb[0].mxu0
      %v640 = vadd.f32 0.0, %v639
      %v641 = vpop.f32.mrb[0].mxu0
      %642 = vmatprep.mubr.bf16.mxu0 0
      %643 = vmatmul.mubr.bf16.gmra.mrb[0].mxu0 %v488
      %v644 = vpop.f32.mrb[0].mxu0
      %v645 = vadd.f32 0.0, %v644
      %v646 = vpop.f32.mrb[0].mxu0
      %v647 = vpop.f32.mrb[0].mxu0
      %v648 = vadd.f32 0.0, %v647
      %v649 = vpop.f32.mrb[0].mxu0
      %650 = vmatprep.mubr.bf16.mxu0 0
      %651 = vmatmul.mubr.bf16.gmra.mrb[0].mxu0 %v489
      %v652 = vpop.f32.mrb[0].mxu0
      %v653 = vadd.f32 0.0, %v652
      %v654 = vpop.f32.mrb[0].mxu0
      %v655 = vpop.f32.mrb[0].mxu0
      %v656 = vadd.f32 0.0, %v655
      %v657 = vpop.f32.mrb[0].mxu0
      %658 = vmatprep.mubr.bf16.mxu0 0
      %659 = vmatmul.mubr.bf16.gmra.mrb[0].mxu0 %v490
      %v660 = vpop.f32.mrb[0].mxu0
      %v661 = vadd.f32 0.0, %v660
      %v662 = vpop.f32.mrb[0].mxu0
      %v663 = vpop.f32.mrb[0].mxu0
      %v664 = vadd.f32 0.0, %v663
      %v665 = vpop.f32.mrb[0].mxu0
      %666 = vmatprep.mubr.bf16.mxu0 0
      %667 = vmatmul.mubr.bf16.gmra.mrb[0].mxu0 %v491
      %v668 = vpop.f32.mrb[0].mxu0
      %v669 = vadd.f32 0.0, %v668
      %v670 = vpop.f32.mrb[0].mxu0
      %v671 = vpop.f32.mrb[0].mxu0
      %v672 = vadd.f32 0.0, %v671
      %v673 = vpop.f32.mrb[0].mxu0
      %674 = vmatprep.mubr.bf16.mxu0 0
      %675 = vmatmul.mubr.bf16.gmra.mrb[0].mxu0 %v492
      %v676 = vpop.f32.mrb[0].mxu0
      %v677 = vadd.f32 0.0, %v676
      %v678 = vpop.f32.mrb[0].mxu0
      %v679 = vpop.f32.mrb[0].mxu0
      %v680 = vadd.f32 0.0, %v679
      %v681 = vpop.f32.mrb[0].mxu0
      %682 = vmatprep.mubr.bf16.mxu0 0
      %683 = vmatmul.mubr.bf16.gmra.mrb[0].mxu0 %v493
      %v684 = vpop.f32.mrb[0].mxu0
      %v685 = vadd.f32 0.0, %v684
      %v686 = vpop.f32.mrb[0].mxu0
      %v687 = vpop.f32.mrb[0].mxu0
      %v688 = vadd.f32 0.0, %v687
      %v689 = vpop.f32.mrb[0].mxu0
      %690 = vmatprep.mubr.bf16.mxu0 0
      %691 = vmatmul.mubr.bf16.gmra.mrb[0].mxu0 %v494
      %v692 = vpop.f32.mrb[0].mxu0
      %v693 = vadd.f32 0.0, %v692
      %v694 = vpop.f32.mrb[0].mxu0
      %v695 = vpop.f32.mrb[0].mxu0
      %v696 = vadd.f32 0.0, %v695
      %v697 = vpop.f32.mrb[0].mxu0
      %698 = vmatprep.mubr.bf16.mxu0 0
      %699 = vmatmul.mubr.bf16.gmra.mrb[0].mxu0 %v495
      %v700 = vpop.f32.mrb[0].mxu0
      %v701 = vadd.f32 0.0, %v700
      %v702 = vpop.f32.mrb[0].mxu0
      %v703 = vpop.f32.mrb[0].mxu0
      %v704 = vadd.f32 0.0, %v703
      %v705 = vpop.f32.mrb[0].mxu0
      %706 = vmatprep.mubr.bf16.mxu0 0
      %707 = vmatmul.mubr.bf16.gmra.mrb[0].mxu0 %v496
      %v708 = vpop.f32.mrb[0].mxu0
      %v709 = vadd.f32 0.0, %v708
      %v710 = vpop.f32.mrb[0].mxu0
      %v711 = vpop.f32.mrb[0].mxu0
      %v712 = vadd.f32 0.0, %v711
      %v713 = vpop.f32.mrb[0].mxu0
      %714 = vmatprep.mubr.bf16.mxu0 0
      %715 = vmatmul.mubr.bf16.gmra.mrb[0].mxu0 %v497
      %v716 = vpop.f32.mrb[0].mxu0
      %v717 = vadd.f32 0.0, %v716
      %v718 = vpop.f32.mrb[0].mxu0
      %v719 = vpop.f32.mrb[0].mxu0
      %v720 = vadd.f32 0.0, %v719
      %v721 = vpop.f32.mrb[0].mxu0
      %722 = vdwg.mxu0
      %v723 = vadd.f32 %v338, %v597
      %v724 = vadd.f32 %v339, %v600
      %v725 = vadd.f32 %v340, %v605
      %v726 = vadd.f32 %v341, %v608
      %v727 = vadd.f32 %v342, %v613
      %v728 = vadd.f32 %v343, %v616
      %v729 = vadd.f32 %v344, %v621
      %v730 = vadd.f32 %v345, %v624
      %v731 = vadd.f32 %v346, %v629
      %v732 = vadd.f32 %v347, %v632
      %v733 = vadd.f32 %v348, %v637
      %v734 = vadd.f32 %v349, %v640
      %v735 = vadd.f32 %v350, %v645
      %v736 = vadd.f32 %v351, %v648
      %v737 = vadd.f32 %v352, %v653
      %v738 = vadd.f32 %v353, %v656
      %v739 = vadd.f32 %v354, %v661
      %v740 = vadd.f32 %v355, %v664
      %v741 = vadd.f32 %v356, %v669
      %v742 = vadd.f32 %v357, %v672
      %v743 = vadd.f32 %v358, %v677
      %v744 = vadd.f32 %v359, %v680
      %v745 = vadd.f32 %v360, %v685
      %v746 = vadd.f32 %v361, %v688
      %v747 = vadd.f32 %v362, %v693
      %v748 = vadd.f32 %v363, %v696
      %v749 = vadd.f32 %v364, %v701
      %v750 = vadd.f32 %v365, %v704
      %v751 = vadd.f32 %v366, %v709
      %v752 = vadd.f32 %v367, %v712
      %v753 = vadd.f32 %v368, %v717
      %v754 = vadd.f32 %v369, %v720
      %vm755 = vcmask 261120
      %756 = vst.msk [vmem:[#allocation2] sm:$0xff] %vm755, %v723
      %757 = vst.msk [vmem:[#allocation2 + $0x8] sm:$0xff] %vm755, %v724
      %758 = vst.msk [vmem:[#allocation2 + $0x10] sm:$0xff] %vm755, %v725
      %759 = vst.msk [vmem:[#allocation2 + $0x18] sm:$0xff] %vm755, %v726
      %760 = vst.msk [vmem:[#allocation2 + $0x20] sm:$0xff] %vm755, %v727
      %761 = vst.msk [vmem:[#allocation2 + $0x28] sm:$0xff] %vm755, %v728
      %762 = vst.msk [vmem:[#allocation2 + $0x30] sm:$0xff] %vm755, %v729
      %763 = vst.msk [vmem:[#allocation2 + $0x38] sm:$0xff] %vm755, %v730
      %764 = vst.msk [vmem:[#allocation2 + $0x40] sm:$0xff] %vm755, %v731
      %765 = vst.msk [vmem:[#allocation2 + $0x48] sm:$0xff] %vm755, %v732
      %766 = vst.msk [vmem:[#allocation2 + $0x50] sm:$0xff] %vm755, %v733
      %767 = vst.msk [vmem:[#allocation2 + $0x58] sm:$0xff] %vm755, %v734
      %768 = vst.msk [vmem:[#allocation2 + $0x60] sm:$0xff] %vm755, %v735
      %769 = vst.msk [vmem:[#allocation2 + $0x68] sm:$0xff] %vm755, %v736
      %770 = vst.msk [vmem:[#allocation2 + $0x70] sm:$0xff] %vm755, %v737
      %771 = vst.msk [vmem:[#allocation2 + $0x78] sm:$0xff] %vm755, %v738
      %772 = vst.msk [vmem:[#allocation2 + $0x80] sm:$0xff] %vm755, %v739
      %773 = vst.msk [vmem:[#allocation2 + $0x88] sm:$0xff] %vm755, %v740
      %774 = vst.msk [vmem:[#allocation2 + $0x90] sm:$0xff] %vm755, %v741
      %775 = vst.msk [vmem:[#allocation2 + $0x98] sm:$0xff] %vm755, %v742
      %776 = vst.msk [vmem:[#allocation2 + $0xa0] sm:$0xff] %vm755, %v743
      %777 = vst.msk [vmem:[#allocation2 + $0xa8] sm:$0xff] %vm755, %v744
      %778 = vst.msk [vmem:[#allocation2 + $0xb0] sm:$0xff] %vm755, %v745
      %779 = vst.msk [vmem:[#allocation2 + $0xb8] sm:$0xff] %vm755, %v746
      %780 = vst.msk [vmem:[#allocation2 + $0xc0] sm:$0xff] %vm755, %v747
      %781 = vst.msk [vmem:[#allocation2 + $0xc8] sm:$0xff] %vm755, %v748
      %782 = vst.msk [vmem:[#allocation2 + $0xd0] sm:$0xff] %vm755, %v749
      %783 = vst.msk [vmem:[#allocation2 + $0xd8] sm:$0xff] %vm755, %v750
      %784 = vst.msk [vmem:[#allocation2 + $0xe0] sm:$0xff] %vm755, %v751
      %785 = vst.msk [vmem:[#allocation2 + $0xe8] sm:$0xff] %vm755, %v752
      %786 = vst.msk [vmem:[#allocation2 + $0xf0] sm:$0xff] %vm755, %v753
      %787 = vst.msk [vmem:[#allocation2 + $0xf8] sm:$0xff] %vm755, %v754
      // Predicated region
      $region41: #{conv2d_fused.1} parent=35 // pred_check
        %p788 = pneg %p301
      $region42: #{conv2d_fused.1} parent=35 // pred_check_branch
        %790 = sbr.rel (%p788) target = $region44
      $region43: #{conv2d_fused.1} parent=35 // pred_region
        %v791 = vld [vmem:[#allocation2] sm:$0xff]
        %v792 = vld [vmem:[#allocation2 + $0x8] sm:$0xff]
        %v793 = vld [vmem:[#allocation2 + $0x10] sm:$0xff]
        %v794 = vld [vmem:[#allocation2 + $0x18] sm:$0xff]
        %v795 = vld [vmem:[#allocation2 + $0x20] sm:$0xff]
        %v796 = vld [vmem:[#allocation2 + $0x28] sm:$0xff]
        %v797 = vld [vmem:[#allocation2 + $0x30] sm:$0xff]
        %v798 = vld [vmem:[#allocation2 + $0x38] sm:$0xff]
        %v799 = vld [vmem:[#allocation2 + $0x40] sm:$0xff]
        %v800 = vld [vmem:[#allocation2 + $0x48] sm:$0xff]
        %v801 = vld [vmem:[#allocation2 + $0x50] sm:$0xff]
        %v802 = vld [vmem:[#allocation2 + $0x58] sm:$0xff]
        %v803 = vld [vmem:[#allocation2 + $0x60] sm:$0xff]
        %v804 = vld [vmem:[#allocation2 + $0x68] sm:$0xff]
        %v805 = vld [vmem:[#allocation2 + $0x70] sm:$0xff]
        %v806 = vld [vmem:[#allocation2 + $0x78] sm:$0xff]
        %v807 = vld [vmem:[#allocation2 + $0x80] sm:$0xff]
        %v808 = vld [vmem:[#allocation2 + $0x88] sm:$0xff]
        %v809 = vld [vmem:[#allocation2 + $0x90] sm:$0xff]
        %v810 = vld [vmem:[#allocation2 + $0x98] sm:$0xff]
        %v811 = vld [vmem:[#allocation2 + $0xa0] sm:$0xff]
        %v812 = vld [vmem:[#allocation2 + $0xa8] sm:$0xff]
        %v813 = vld [vmem:[#allocation2 + $0xb0] sm:$0xff]
        %v814 = vld [vmem:[#allocation2 + $0xb8] sm:$0xff]
        %v815 = vld [vmem:[#allocation2 + $0xc0] sm:$0xff]
        %v816 = vld [vmem:[#allocation2 + $0xc8] sm:$0xff]
        %v817 = vld [vmem:[#allocation2 + $0xd0] sm:$0xff]
        %v818 = vld [vmem:[#allocation2 + $0xd8] sm:$0xff]
        %v819 = vld [vmem:[#allocation2 + $0xe0] sm:$0xff]
        %v820 = vld [vmem:[#allocation2 + $0xe8] sm:$0xff]
        %v821 = vld [vmem:[#allocation2 + $0xf0] sm:$0xff]
        %v822 = vld [vmem:[#allocation2 + $0xf8] sm:$0xff]
        %vm823 = vcmp.ge.f32.partialorder %v791, 0.0
        %vm824 = vcmp.ge.f32.partialorder %v792, 0.0
        %vm825 = vcmp.ge.f32.partialorder %v793, 0.0
        %vm826 = vcmp.ge.f32.partialorder %v794, 0.0
        %vm827 = vcmp.ge.f32.partialorder %v795, 0.0
        %vm828 = vcmp.ge.f32.partialorder %v796, 0.0
        %vm829 = vcmp.ge.f32.partialorder %v797, 0.0
        %vm830 = vcmp.ge.f32.partialorder %v798, 0.0
        %vm831 = vcmp.ge.f32.partialorder %v799, 0.0
        %vm832 = vcmp.ge.f32.partialorder %v800, 0.0
        %vm833 = vcmp.ge.f32.partialorder %v801, 0.0
        %vm834 = vcmp.ge.f32.partialorder %v802, 0.0
        %vm835 = vcmp.ge.f32.partialorder %v803, 0.0
        %vm836 = vcmp.ge.f32.partialorder %v804, 0.0
        %vm837 = vcmp.ge.f32.partialorder %v805, 0.0
        %vm838 = vcmp.ge.f32.partialorder %v806, 0.0
        %vm839 = vcmp.ge.f32.partialorder %v807, 0.0
        %vm840 = vcmp.ge.f32.partialorder %v808, 0.0
        %vm841 = vcmp.ge.f32.partialorder %v809, 0.0
        %vm842 = vcmp.ge.f32.partialorder %v810, 0.0
        %vm843 = vcmp.ge.f32.partialorder %v811, 0.0
        %vm844 = vcmp.ge.f32.partialorder %v812, 0.0
        %vm845 = vcmp.ge.f32.partialorder %v813, 0.0
        %vm846 = vcmp.ge.f32.partialorder %v814, 0.0
        %vm847 = vcmp.ge.f32.partialorder %v815, 0.0
        %vm848 = vcmp.ge.f32.partialorder %v816, 0.0
        %vm849 = vcmp.ge.f32.partialorder %v817, 0.0
        %vm850 = vcmp.ge.f32.partialorder %v818, 0.0
        %vm851 = vcmp.ge.f32.partialorder %v819, 0.0
        %vm852 = vcmp.ge.f32.partialorder %v820, 0.0
        %vm853 = vcmp.ge.f32.partialorder %v821, 0.0
        %vm854 = vcmp.ge.f32.partialorder %v822, 0.0
        %v855 = vmul.f32 %v791, 0.1
        %v856 = vmul.f32 %v792, 0.1
        %v857 = vmul.f32 %v793, 0.1
        %v858 = vmul.f32 %v794, 0.1
        %v859 = vmul.f32 %v795, 0.1
        %v860 = vmul.f32 %v796, 0.1
        %v861 = vmul.f32 %v797, 0.1
        %v862 = vmul.f32 %v798, 0.1
        %v863 = vmul.f32 %v799, 0.1
        %v864 = vmul.f32 %v800, 0.1
        %v865 = vmul.f32 %v801, 0.1
        %v866 = vmul.f32 %v802, 0.1
        %v867 = vmul.f32 %v803, 0.1
        %v868 = vmul.f32 %v804, 0.1
        %v869 = vmul.f32 %v805, 0.1
        %v870 = vmul.f32 %v806, 0.1
        %v871 = vmul.f32 %v807, 0.1
        %v872 = vmul.f32 %v808, 0.1
        %v873 = vmul.f32 %v809, 0.1
        %v874 = vmul.f32 %v810, 0.1
        %v875 = vmul.f32 %v811, 0.1
        %v876 = vmul.f32 %v812, 0.1
        %v877 = vmul.f32 %v813, 0.1
        %v878 = vmul.f32 %v814, 0.1
        %v879 = vmul.f32 %v815, 0.1
        %v880 = vmul.f32 %v816, 0.1
        %v881 = vmul.f32 %v817, 0.1
        %v882 = vmul.f32 %v818, 0.1
        %v883 = vmul.f32 %v819, 0.1
        %v884 = vmul.f32 %v820, 0.1
        %v885 = vmul.f32 %v821, 0.1
        %v886 = vmul.f32 %v822, 0.1
        %v887 = vsel %vm823, %v791, %v855
        %v888 = vsel %vm824, %v792, %v856
        %v889 = vsel %vm825, %v793, %v857
        %v890 = vsel %vm826, %v794, %v858
        %v891 = vsel %vm827, %v795, %v859
        %v892 = vsel %vm828, %v796, %v860
        %v893 = vsel %vm829, %v797, %v861
        %v894 = vsel %vm830, %v798, %v862
        %v895 = vsel %vm831, %v799, %v863
        %v896 = vsel %vm832, %v800, %v864
        %v897 = vsel %vm833, %v801, %v865
        %v898 = vsel %vm834, %v802, %v866
        %v899 = vsel %vm835, %v803, %v867
        %v900 = vsel %vm836, %v804, %v868
        %v901 = vsel %vm837, %v805, %v869
        %v902 = vsel %vm838, %v806, %v870
        %v903 = vsel %vm839, %v807, %v871
        %v904 = vsel %vm840, %v808, %v872
        %v905 = vsel %vm841, %v809, %v873
        %v906 = vsel %vm842, %v810, %v874
        %v907 = vsel %vm843, %v811, %v875
        %v908 = vsel %vm844, %v812, %v876
        %v909 = vsel %vm845, %v813, %v877
        %v910 = vsel %vm846, %v814, %v878
        %v911 = vsel %vm847, %v815, %v879
        %v912 = vsel %vm848, %v816, %v880
        %v913 = vsel %vm849, %v817, %v881
        %v914 = vsel %vm850, %v818, %v882
        %v915 = vsel %vm851, %v819, %v883
        %v916 = vsel %vm852, %v820, %v884
        %v917 = vsel %vm853, %v821, %v885
        %v918 = vsel %vm854, %v822, %v886
        %v919 = vld [vmem:[%s287] sm:$0x1]
        %v921 = vlaneseq
        %v922 = vshrl.u32 %v921, 7
        %v923 = vsub.s32 0, %v922
        %v924 = vrot.slane %v919, %v923
        %v926 = vmul.f32 %v887, %v924
        %v927 = vmul.f32 %v888, %v924
        %v928 = vmul.f32 %v889, %v924
        %v929 = vmul.f32 %v890, %v924
        %v930 = vmul.f32 %v891, %v924
        %v931 = vmul.f32 %v892, %v924
        %v932 = vmul.f32 %v893, %v924
        %v933 = vmul.f32 %v894, %v924
        %v934 = vmul.f32 %v895, %v924
        %v935 = vmul.f32 %v896, %v924
        %v936 = vmul.f32 %v897, %v924
        %v937 = vmul.f32 %v898, %v924
        %v938 = vmul.f32 %v899, %v924
        %v939 = vmul.f32 %v900, %v924
        %v940 = vmul.f32 %v901, %v924
        %v941 = vmul.f32 %v902, %v924
        %v942 = vmul.f32 %v903, %v924
        %v943 = vmul.f32 %v904, %v924
        %v944 = vmul.f32 %v905, %v924
        %v945 = vmul.f32 %v906, %v924
        %v946 = vmul.f32 %v907, %v924
        %v947 = vmul.f32 %v908, %v924
        %v948 = vmul.f32 %v909, %v924
        %v949 = vmul.f32 %v910, %v924
        %v950 = vmul.f32 %v911, %v924
        %v951 = vmul.f32 %v912, %v924
        %v952 = vmul.f32 %v913, %v924
        %v953 = vmul.f32 %v914, %v924
        %v954 = vmul.f32 %v915, %v924
        %v955 = vmul.f32 %v916, %v924
        %v956 = vmul.f32 %v917, %v924
        %v957 = vmul.f32 %v918, %v924
        %v958 = vld [vmem:[%s290] sm:$0x1]
        %v960 = vlaneseq
        %v961 = vshrl.u32 %v960, 7
        %v962 = vsub.s32 0, %v961
        %v963 = vrot.slane %v958, %v962
        %v965 = vadd.f32 %v926, %v963
        %v966 = vadd.f32 %v927, %v963
        %v967 = vadd.f32 %v928, %v963
        %v968 = vadd.f32 %v929, %v963
        %v969 = vadd.f32 %v930, %v963
        %v970 = vadd.f32 %v931, %v963
        %v971 = vadd.f32 %v932, %v963
        %v972 = vadd.f32 %v933, %v963
        %v973 = vadd.f32 %v934, %v963
        %v974 = vadd.f32 %v935, %v963
        %v975 = vadd.f32 %v936, %v963
        %v976 = vadd.f32 %v937, %v963
        %v977 = vadd.f32 %v938, %v963
        %v978 = vadd.f32 %v939, %v963
        %v979 = vadd.f32 %v940, %v963
        %v980 = vadd.f32 %v941, %v963
        %v981 = vadd.f32 %v942, %v963
        %v982 = vadd.f32 %v943, %v963
        %v983 = vadd.f32 %v944, %v963
        %v984 = vadd.f32 %v945, %v963
        %v985 = vadd.f32 %v946, %v963
        %v986 = vadd.f32 %v947, %v963
        %v987 = vadd.f32 %v948, %v963
        %v988 = vadd.f32 %v949, %v963
        %v989 = vadd.f32 %v950, %v963
        %v990 = vadd.f32 %v951, %v963
        %v991 = vadd.f32 %v952, %v963
        %v992 = vadd.f32 %v953, %v963
        %v993 = vadd.f32 %v954, %v963
        %v994 = vadd.f32 %v955, %v963
        %v995 = vadd.f32 %v956, %v963
        %v996 = vadd.f32 %v957, %v963
        %v997 = vpack.c.bf16 %v966, %v965
        %v998 = vpack.c.bf16 %v968, %v967
        %v999 = vpack.c.bf16 %v970, %v969
        %v1000 = vpack.c.bf16 %v972, %v971
        %v1001 = vpack.c.bf16 %v974, %v973
        %v1002 = vpack.c.bf16 %v976, %v975
        %v1003 = vpack.c.bf16 %v978, %v977
        %v1004 = vpack.c.bf16 %v980, %v979
        %v1005 = vpack.c.bf16 %v982, %v981
        %v1006 = vpack.c.bf16 %v984, %v983
        %v1007 = vpack.c.bf16 %v986, %v985
        %v1008 = vpack.c.bf16 %v988, %v987
        %v1009 = vpack.c.bf16 %v990, %v989
        %v1010 = vpack.c.bf16 %v992, %v991
        %v1011 = vpack.c.bf16 %v994, %v993
        %v1012 = vpack.c.bf16 %v996, %v995
        %v1029 = vunpack.c.l.b16 %v997
        %v1030 = vunpack.c.h.b16 %v997
        %v1031 = vunpack.c.l.b16 %v998
        %v1032 = vunpack.c.h.b16 %v998
        %v1033 = vunpack.c.l.b16 %v999
        %v1034 = vunpack.c.h.b16 %v999
        %v1035 = vunpack.c.l.b16 %v1000
        %v1036 = vunpack.c.h.b16 %v1000
        %v1037 = vunpack.c.l.b16 %v1001
        %v1038 = vunpack.c.h.b16 %v1001
        %v1039 = vunpack.c.l.b16 %v1002
        %v1040 = vunpack.c.h.b16 %v1002
        %v1041 = vunpack.c.l.b16 %v1003
        %v1042 = vunpack.c.h.b16 %v1003
        %v1043 = vunpack.c.l.b16 %v1004
        %v1044 = vunpack.c.h.b16 %v1004
        %v1045 = vunpack.c.l.b16 %v1005
        %v1046 = vunpack.c.h.b16 %v1005
        %v1047 = vunpack.c.l.b16 %v1006
        %v1048 = vunpack.c.h.b16 %v1006
        %v1049 = vunpack.c.l.b16 %v1007
        %v1050 = vunpack.c.h.b16 %v1007
        %v1051 = vunpack.c.l.b16 %v1008
        %v1052 = vunpack.c.h.b16 %v1008
        %v1053 = vunpack.c.l.b16 %v1009
        %v1054 = vunpack.c.h.b16 %v1009
        %v1055 = vunpack.c.l.b16 %v1010
        %v1056 = vunpack.c.h.b16 %v1010
        %v1057 = vunpack.c.l.b16 %v1011
        %v1058 = vunpack.c.h.b16 %v1011
        %v1059 = vunpack.c.l.b16 %v1012
        %v1060 = vunpack.c.h.b16 %v1012
        %v1061 = vpack.c.b16 %v1029, %v1029
        %v1062 = vpack.c.b16 %v1030, %v1030
        %v1063 = vpack.c.b16 %v1031, %v1031
        %v1064 = vpack.c.b16 %v1032, %v1032
        %v1065 = vpack.c.b16 %v1033, %v1033
        %v1066 = vpack.c.b16 %v1034, %v1034
        %v1067 = vpack.c.b16 %v1035, %v1035
        %v1068 = vpack.c.b16 %v1036, %v1036
        %v1069 = vpack.c.b16 %v1037, %v1037
        %v1070 = vpack.c.b16 %v1038, %v1038
        %v1071 = vpack.c.b16 %v1039, %v1039
        %v1072 = vpack.c.b16 %v1040, %v1040
        %v1073 = vpack.c.b16 %v1041, %v1041
        %v1074 = vpack.c.b16 %v1042, %v1042
        %v1075 = vpack.c.b16 %v1043, %v1043
        %v1076 = vpack.c.b16 %v1044, %v1044
        %v1077 = vpack.c.b16 %v1045, %v1045
        %v1078 = vpack.c.b16 %v1046, %v1046
        %v1079 = vpack.c.b16 %v1047, %v1047
        %v1080 = vpack.c.b16 %v1048, %v1048
        %v1081 = vpack.c.b16 %v1049, %v1049
        %v1082 = vpack.c.b16 %v1050, %v1050
        %v1083 = vpack.c.b16 %v1051, %v1051
        %v1084 = vpack.c.b16 %v1052, %v1052
        %v1085 = vpack.c.b16 %v1053, %v1053
        %v1086 = vpack.c.b16 %v1054, %v1054
        %v1087 = vpack.c.b16 %v1055, %v1055
        %v1088 = vpack.c.b16 %v1056, %v1056
        %v1089 = vpack.c.b16 %v1057, %v1057
        %v1090 = vpack.c.b16 %v1058, %v1058
        %v1091 = vpack.c.b16 %v1059, %v1059
        %v1092 = vpack.c.b16 %v1060, %v1060
        %vm1125 = vcmask 257024
        %1126 = vst.msk [vmem:[%s298] sm:$0xf] %vm1125, %v1061
        %1127 = vst.msk [vmem:[%s298 + $0x4] sm:$0xf] %vm1125, %v1062
        %1128 = vst.msk [vmem:[%s298 + $0x8] sm:$0xf] %vm1125, %v1063
        %1129 = vst.msk [vmem:[%s298 + $0xc] sm:$0xf] %vm1125, %v1064
        %1130 = vst.msk [vmem:[%s298 + $0x10] sm:$0xf] %vm1125, %v1065
        %1131 = vst.msk [vmem:[%s298 + $0x14] sm:$0xf] %vm1125, %v1066
        %1132 = vst.msk [vmem:[%s298 + $0x18] sm:$0xf] %vm1125, %v1067
        %1133 = vst.msk [vmem:[%s298 + $0x1c] sm:$0xf] %vm1125, %v1068
        %1134 = vst.msk [vmem:[%s298 + $0x20] sm:$0xf] %vm1125, %v1069
        %1135 = vst.msk [vmem:[%s298 + $0x24] sm:$0xf] %vm1125, %v1070
        %1136 = vst.msk [vmem:[%s298 + $0x28] sm:$0xf] %vm1125, %v1071
        %1137 = vst.msk [vmem:[%s298 + $0x2c] sm:$0xf] %vm1125, %v1072
        %1138 = vst.msk [vmem:[%s298 + $0x30] sm:$0xf] %vm1125, %v1073
        %1139 = vst.msk [vmem:[%s298 + $0x34] sm:$0xf] %vm1125, %v1074
        %1140 = vst.msk [vmem:[%s298 + $0x38] sm:$0xf] %vm1125, %v1075
        %1141 = vst.msk [vmem:[%s298 + $0x3c] sm:$0xf] %vm1125, %v1076
        %1142 = vst.msk [vmem:[%s298 + $0x40] sm:$0xf] %vm1125, %v1077
        %1143 = vst.msk [vmem:[%s298 + $0x44] sm:$0xf] %vm1125, %v1078
        %1144 = vst.msk [vmem:[%s298 + $0x48] sm:$0xf] %vm1125, %v1079
        %1145 = vst.msk [vmem:[%s298 + $0x4c] sm:$0xf] %vm1125, %v1080
        %1146 = vst.msk [vmem:[%s298 + $0x50] sm:$0xf] %vm1125, %v1081
        %1147 = vst.msk [vmem:[%s298 + $0x54] sm:$0xf] %vm1125, %v1082
        %1148 = vst.msk [vmem:[%s298 + $0x58] sm:$0xf] %vm1125, %v1083
        %1149 = vst.msk [vmem:[%s298 + $0x5c] sm:$0xf] %vm1125, %v1084
        %1150 = vst.msk [vmem:[%s298 + $0x60] sm:$0xf] %vm1125, %v1085
        %1151 = vst.msk [vmem:[%s298 + $0x64] sm:$0xf] %vm1125, %v1086
        %1152 = vst.msk [vmem:[%s298 + $0x68] sm:$0xf] %vm1125, %v1087
        %1153 = vst.msk [vmem:[%s298 + $0x6c] sm:$0xf] %vm1125, %v1088
        %1154 = vst.msk [vmem:[%s298 + $0x70] sm:$0xf] %vm1125, %v1089
        %1155 = vst.msk [vmem:[%s298 + $0x74] sm:$0xf] %vm1125, %v1090
        %1156 = vst.msk [vmem:[%s298 + $0x78] sm:$0xf] %vm1125, %v1091
        %1157 = vst.msk [vmem:[%s298 + $0x7c] sm:$0xf] %vm1125, %v1092
      $region44: #{conv2d_fused.1} parent=35 // pred_fallthru
        _
      %s1158 = smul.u32 32, %s20
      %p1159 = scmp.lt.s32.totalorder %s1158, 1023
      %s1160 = scalar_select %p1159, %s1158, 1023
      %p1161 = scmp.lt.s32.totalorder %s21, 0
      %s1162 = scalar_select %p1161, %s21, 0
      %s1163 = sadd.s32 %s1162, %s1160
      %s1164 = smul.addr %s1163, 4
      %s1165 = scalar_lea.vmem %s4, %s1164
      // Predicated region
      $region45: #{conv2d_fused.1} parent=35 // pred_check
        %p1166 = pneg %p162
      $region46: #{conv2d_fused.1} parent=35 // pred_check_branch
        %1168 = sbr.rel (%p1166) target = $region48
      $region47: #{conv2d_fused.1} parent=35 // pred_region
        %s1169 = smul.u32 32, %s20
      $region48: #{conv2d_fused.1} parent=35 // pred_fallthru
        _
    $region36: #{conv2d_fused.1} parent=5 // pred_fallthru
      _
    %p1170 = scmp.le.s32.totalorder 2, %s10
    // Predicated region
    $region49: #{conv2d_fused.1} parent=5 // pred_check
      %p1171 = pneg %p1170
    $region50: #{conv2d_fused.1} parent=5 // pred_check_branch
      %1173 = sbr.rel (%p1171) target = $region52
    $region51: #{conv2d_fused.1} parent=5 // pred_region
      %s1174 = ssub.s32 %s10, 2
      // Predicated region
      $region53: #{conv2d_fused.1} parent=51 // pred_check
        %p1175 = pneg %p168
      $region54: #{conv2d_fused.1} parent=51 // pred_check_branch
        %1177 = sbr.rel (%p1175) target = $region56
      $region55: #{conv2d_fused.1} parent=51 // pred_region
        %s1178 = smul.u32 32, %s23
        %p1179 = scmp.lt.s32.totalorder %s1178, 1023
        %s1180 = scalar_select %p1179, %s1178, 1023
        %p1181 = scmp.lt.s32.totalorder %s24, 0
        %s1182 = scalar_select %p1181, %s24, 0
        %s1183 = sadd.s32 %s1182, %s1180
        %s1184 = smul.addr %s1183, 4
        %s1185 = scalar_lea.vmem %s4, %s1184
      $region56: #{conv2d_fused.1} parent=51 // pred_fallthru
        _
    $region52: #{conv2d_fused.1} parent=5 // pred_fallthru
      _
  $region6: #{conv2d_fused.1} parent=0 // loop_footer
    %s14 = sadd.s32 1, %s10
  $region7: #{conv2d_fused.1} parent=0 // loop_footer_branch
    %9 = sbr.rel target = $region3
  $region8: #{conv2d_fused.1} parent=0 // loop_exit
    _

</llo_original>
